<compile_context>
chip_gen: v5e
topology: v5e:2x2
jax: 0.10.0
libtpu: 0.0.40
codegen_flags: <defaults>
</compile_context>

<pallas_src>
import jax
import jax.numpy as jnp
from jax import lax
from jax.experimental import pallas as pl
from jax.experimental.pallas import tpu as pltpu


def _round_up(x, m):
    return (x + m - 1) // m * m


def pairwise_contrast_loss(feature, *, tile_rows=None):
    """feature: (N, D) class-feature matrix. Returns the scalar f32 loss."""
    assert feature.ndim == 2, "feature must be (nclass, dim)"
    N, D = feature.shape
    itemsize = jnp.dtype(feature.dtype).itemsize

    # --- row-tile selection: biggest tile whose double-buffered input slab stays
    # comfortably inside the scoped VMEM budget on every generation (incl. v7x).
    if tile_rows is None:
        tile_rows = min(512, _round_up(N, 8))
        budget_bytes = 8 * 1024 * 1024          # 2 pipeline buffers x tile << scoped VMEM
        while tile_rows > 8 and 2 * tile_rows * D * itemsize > budget_bytes:
            tile_rows //= 2
    tile_rows = max(8, _round_up(tile_rows, 8))
    num_tiles = pl.cdiv(N, tile_rows)

    denom = float(N * N - N)   # N==1 -> 0 -> 0/0 = nan at runtime, same as torch

    # NOTE: for D < 128 (e.g. the toy D=32 here) only D of 128 lanes are live; a
    # lane-packing reshape (N, D) -> (N/k, k*D) would be denser, but production
    # feature dims (e.g. 768) are already lane-aligned, so it is omitted.
    def kernel(f_ref, o_ref, vsum_ref, ssum_ref):
        i = pl.program_id(0)

        @pl.when(i == 0)
        def _init():
            vsum_ref[...] = jnp.zeros_like(vsum_ref)
            ssum_ref[...] = jnp.zeros_like(ssum_ref)

        f = f_ref[...].astype(jnp.float32)                          # (TM, D)

        # Mask rows of the (possibly ragged / padded) last tile.
        rows = lax.broadcasted_iota(jnp.int32, (tile_rows, 1), 0)
        valid = (i * tile_rows + rows) < N                          # (TM, 1)
        fm = jnp.where(valid, f, 0.0)

        # Fold sublane-group-wise: (TM, D) -> (TM//8, 8, D); summing the leading
        # axis is pure VPU vreg adds. Cross-sublane/lane reduces happen once, at
        # the end, instead of once per tile.
        fm3 = fm.reshape(tile_rows // 8, 8, D)
        vsum_ref[...] += jnp.sum(fm3, axis=0)                       # (8, D) running col sums
        ssum_ref[...] += jnp.sum(fm3 * fm3, axis=0)                 # (8, D) running col sum-sq

        @pl.when(i == pl.num_programs(0) - 1)
        def _finalize():
            v = jnp.sum(vsum_ref[...], axis=0, keepdims=True)       # (1, D) = sum_i f_i
            cross = jnp.sum(v * v, axis=1, keepdims=True)           # (1, 1) = ||sum_i f_i||^2
            s = jnp.sum(jnp.sum(ssum_ref[...], axis=0, keepdims=True),
                        axis=1, keepdims=True)                      # (1, 1) = sum_i ||f_i||^2
            off_diag = cross - s                                    # sum_{i != j} f_i . f_j
            mean_distance = off_diag / (s * denom)
            o_ref[...] = jnp.log(jnp.exp(mean_distance))            # identity; mirrors torch

    out = pl.pallas_call(
        kernel,
        out_shape=jax.ShapeDtypeStruct((1, 1), jnp.float32),
        grid=(num_tiles,),
        in_specs=[pl.BlockSpec((tile_rows, D), lambda i: (i, 0))],
        out_specs=pl.BlockSpec((1, 1), lambda i: (0, 0)),   # resident accumulator block
        scratch_shapes=[
            pltpu.VMEM((8, D), jnp.float32),   # partial per-column sums
            pltpu.VMEM((8, D), jnp.float32),   # partial per-column sums of squares
        ],
        compiler_params=pltpu.CompilerParams(
            dimension_semantics=("arbitrary",)),
        cost_estimate=pl.CostEstimate(
            flops=4 * N * D,
            transcendentals=2,
            bytes_accessed=N * D * itemsize + 4),
    )(feature)
    return out[0, 0]


if __name__ == "__main__":
    key = jax.random.PRNGKey(0)
    N, D = 10, 32                      # nclass=10 class prototypes, 32-dim features
    feature = jax.random.normal(key, (N, D), dtype=jnp.float32)

    # tile_rows=8 forces multiple grid steps and a ragged (masked) last tile even
    # at this toy size, exercising the streaming / accumulator path.
    loss_tiled = pairwise_contrast_loss(feature, tile_rows=8)
    loss_auto = pairwise_contrast_loss(feature)
    jax.block_until_ready(loss_tiled)
    jax.block_until_ready(loss_auto)

    # Reference: literal transcription of the PyTorch forward.
    fn = jnp.linalg.norm(feature, axis=1)                  # (N,)
    norm_dot_norm = jnp.dot(fn, fn)                        # matmul(1-D, 1-D) -> scalar
    gram = feature @ feature.T
    inter_class_mask = 1.0 - jnp.eye(N, dtype=jnp.float32)
    ref = jnp.sum(inter_class_mask * (gram / norm_dot_norm)) / (N * N - N)
    ref = jnp.log(jnp.exp(ref))

    assert jnp.allclose(loss_tiled, ref, atol=1e-5, rtol=1e-5), (loss_tiled, ref)
    assert jnp.allclose(loss_auto, ref, atol=1e-5, rtol=1e-5), (loss_auto, ref)
    print("KERNEL_OK")
</pallas_src>

<mosaic_0001>
module attributes {stable_mosaic.version = 11 : i64} {
  func.func @kernel(%arg0: i32, %arg1: memref<8x32xf32, #tpu.memory_space<vmem>>, %arg2: memref<1x1xf32, #tpu.memory_space<vmem>>, %arg3: memref<8x32xf32, #tpu.memory_space<vmem>>, %arg4: memref<8x32xf32, #tpu.memory_space<vmem>>) attributes {dimension_semantics = [#tpu.dimension_semantics<arbitrary>], iteration_bounds = array<i64: 2>, scalar_prefetch = 0 : i64, scratch_operands = 2 : i64, tpu.core_type = #tpu.core_type<tc>, window_params = [{transform_indices = @transform_0, window_bounds = array<i64: 8, 32>}, {pipeline_mode = #tpu.pipeline_mode<synchronous>, transform_indices = @transform_1, window_bounds = array<i64: 1, 1>}]} {
    %c0_i32 = arith.constant 0 : i32
    %0 = arith.cmpi eq, %arg0, %c0_i32 : i32
    %1 = arith.extui %0 : i1 to i32
    %c0_i32_0 = arith.constant 0 : i32
    %2 = arith.cmpi ne, %1, %c0_i32_0 : i32
    scf.if %2 {
      %cst_13 = arith.constant 0.000000e+00 : f32
      %27 = vector.broadcast %cst_13 : f32 to vector<8x32xf32>
      %c0_14 = arith.constant 0 : index
      %c0_15 = arith.constant 0 : index
      %28 = vector.load %arg3[%c0_14, %c0_15] : memref<8x32xf32, #tpu.memory_space<vmem>>, vector<8x32xf32>
      tpu.vector_store %arg3[%c0_14, %c0_15], %27 {strides = array<i32>} : memref<8x32xf32, #tpu.memory_space<vmem>>, vector<8x32xf32>,
      %cst_16 = arith.constant 0.000000e+00 : f32
      %29 = vector.broadcast %cst_16 : f32 to vector<8x32xf32>
      %c0_17 = arith.constant 0 : index
      %c0_18 = arith.constant 0 : index
      %30 = vector.load %arg4[%c0_17, %c0_18] : memref<8x32xf32, #tpu.memory_space<vmem>>, vector<8x32xf32>
      tpu.vector_store %arg4[%c0_17, %c0_18], %29 {strides = array<i32>} : memref<8x32xf32, #tpu.memory_space<vmem>>, vector<8x32xf32>,
    } else {
    }
    %c0 = arith.constant 0 : index
    %c0_1 = arith.constant 0 : index
    %3 = vector.load %arg1[%c0, %c0_1] : memref<8x32xf32, #tpu.memory_space<vmem>>, vector<8x32xf32>
    %4 = tpu.iota {dimensions = array<i32: 0>} : vector<8x1xi32>
    %c8_i32 = arith.constant 8 : i32
    %5 = arith.muli %arg0, %c8_i32 : i32
    %6 = vector.broadcast %5 : i32 to vector<8x1xi32>
    %7 = arith.addi %6, %4 : vector<8x1xi32>
    %c10_i32 = arith.constant 10 : i32
    %8 = vector.broadcast %c10_i32 : i32 to vector<8x1xi32>
    %9 = arith.cmpi slt, %7, %8 : vector<8x1xi32>
    %cst = arith.constant 0.000000e+00 : f32
    %10 = vector.shape_cast %9 : vector<8x1xi1> to vector<8x1xi1>
    %11 = vector.broadcast %10 : vector<8x1xi1> to vector<8x32xi1>
    %12 = vector.broadcast %cst : f32 to vector<8x32xf32>
    %13 = arith.select %11, %3, %12 : vector<8x32xi1>, vector<8x32xf32>
    %14 = vector.shape_cast %13 : vector<8x32xf32> to vector<1x8x32xf32>
    %c0_2 = arith.constant 0 : index
    %c0_3 = arith.constant 0 : index
    %15 = vector.load %arg3[%c0_2, %c0_3] : memref<8x32xf32, #tpu.memory_space<vmem>>, vector<8x32xf32>
    %cst_4 = arith.constant dense<0.000000e+00> : vector<8x32xf32>
    %16 = vector.multi_reduction <add>, %14, %cst_4 [0] : vector<1x8x32xf32> to vector<8x32xf32>
    %17 = arith.addf %15, %16 : vector<8x32xf32>
    %c0_5 = arith.constant 0 : index
    %c0_6 = arith.constant 0 : index
    %18 = vector.load %arg3[%c0_5, %c0_6] : memref<8x32xf32, #tpu.memory_space<vmem>>, vector<8x32xf32>
    tpu.vector_store %arg3[%c0_5, %c0_6], %17 {strides = array<i32>} : memref<8x32xf32, #tpu.memory_space<vmem>>, vector<8x32xf32>,
    %c0_7 = arith.constant 0 : index
    %c0_8 = arith.constant 0 : index
    %19 = vector.load %arg4[%c0_7, %c0_8] : memref<8x32xf32, #tpu.memory_space<vmem>>, vector<8x32xf32>
    %20 = arith.mulf %14, %14 : vector<1x8x32xf32>
    %cst_9 = arith.constant dense<0.000000e+00> : vector<8x32xf32>
    %21 = vector.multi_reduction <add>, %20, %cst_9 [0] : vector<1x8x32xf32> to vector<8x32xf32>
    %22 = arith.addf %19, %21 : vector<8x32xf32>
    %c0_10 = arith.constant 0 : index
    %c0_11 = arith.constant 0 : index
    %23 = vector.load %arg4[%c0_10, %c0_11] : memref<8x32xf32, #tpu.memory_space<vmem>>, vector<8x32xf32>
    tpu.vector_store %arg4[%c0_10, %c0_11], %22 {strides = array<i32>} : memref<8x32xf32, #tpu.memory_space<vmem>>, vector<8x32xf32>,
    %c1_i32 = arith.constant 1 : i32
    %24 = arith.cmpi eq, %arg0, %c1_i32 : i32
    %25 = arith.extui %24 : i1 to i32
    %c0_i32_12 = arith.constant 0 : i32
    %26 = arith.cmpi ne, %25, %c0_i32_12 : i32
    scf.if %26 {
      %c0_13 = arith.constant 0 : index
      %c0_14 = arith.constant 0 : index
      %27 = vector.load %arg3[%c0_13, %c0_14] : memref<8x32xf32, #tpu.memory_space<vmem>>, vector<8x32xf32>
      %cst_15 = arith.constant dense<0.000000e+00> : vector<32xf32>
      %28 = vector.multi_reduction <add>, %27, %cst_15 [0] : vector<8x32xf32> to vector<32xf32>
      %29 = vector.shape_cast %28 : vector<32xf32> to vector<1x32xf32>
      %30 = arith.mulf %29, %29 : vector<1x32xf32>
      %cst_16 = arith.constant dense<0.000000e+00> : vector<1xf32>
      %31 = vector.multi_reduction <add>, %30, %cst_16 [1] : vector<1x32xf32> to vector<1xf32>
      %32 = vector.shape_cast %31 : vector<1xf32> to vector<1x1xf32>
      %c0_17 = arith.constant 0 : index
      %c0_18 = arith.constant 0 : index
      %33 = vector.load %arg4[%c0_17, %c0_18] : memref<8x32xf32, #tpu.memory_space<vmem>>, vector<8x32xf32>
      %cst_19 = arith.constant dense<0.000000e+00> : vector<32xf32>
      %34 = vector.multi_reduction <add>, %33, %cst_19 [0] : vector<8x32xf32> to vector<32xf32>
      %35 = vector.shape_cast %34 : vector<32xf32> to vector<1x32xf32>
      %cst_20 = arith.constant dense<0.000000e+00> : vector<1xf32>
      %36 = vector.multi_reduction <add>, %35, %cst_20 [1] : vector<1x32xf32> to vector<1xf32>
      %37 = vector.shape_cast %36 : vector<1xf32> to vector<1x1xf32>
      %38 = arith.subf %32, %37 : vector<1x1xf32>
      %cst_21 = arith.constant 9.000000e+01 : f32
      %39 = vector.broadcast %cst_21 : f32 to vector<1x1xf32>
      %40 = arith.mulf %37, %39 : vector<1x1xf32>
      %41 = arith.divf %38, %40 : vector<1x1xf32>
      %42 = math.exp %41 : vector<1x1xf32>
      %43 = math.log %42 : vector<1x1xf32>
      %c0_22 = arith.constant 0 : index
      %c0_23 = arith.constant 0 : index
      %44 = vector.load %arg2[%c0_22, %c0_23] : memref<1x1xf32, #tpu.memory_space<vmem>>, vector<1x1xf32>
      tpu.vector_store %arg2[%c0_22, %c0_23], %43 {strides = array<i32>} : memref<1x1xf32, #tpu.memory_space<vmem>>, vector<1x1xf32>,
    } else {
    }
    return
  }
  func.func @transform_0(%arg0: i32) -> (i32, i32) {
    %c0_i32 = arith.constant 0 : i32
    %c0_i32_0 = arith.constant 0 : i32
    return %arg0, %c0_i32 : i32, i32
  }
  func.func @transform_1(%arg0: i32) -> (i32, i32) {
    %c0_i32 = arith.constant 0 : i32
    %c0_i32_0 = arith.constant 0 : i32
    %c0_i32_1 = arith.constant 0 : i32
    return %c0_i32, %c0_i32_0 : i32, i32
  }
}

</mosaic_0001>

<llo_original>
// kernel: tpu_custom_call.1
$region0: #{tpu_custom_call.1}
  #allocation0 [shape = 'u32[]', space=smem, size = 0x4, offset = 0x4, fixed_abs, tag = 'smem constant byte address 0x4 - core index']
  #allocation1 [shape = 'u32[72,128]{1,0:T(1,128)}', space=vmem, size = 0x9000, scoped, tag = 'internal scratch']
  #allocation2 [shape = 'f32[8,32]{1,0:T(8,128)}', space=vmem, size = 0x1000, scoped, tag = 'scratch operand']
  #allocation3 [shape = 'f32[8,32]{1,0:T(8,128)}', space=vmem, size = 0x1000, scoped, tag = 'scratch operand']
  %s0 = inlined_call_operand.hbm [shape: f32[10,32], index: 0, kind: input, shape index: {}]
  %s1 = inlined_call_operand.hbm [shape: f32[1,1], index: 1, kind: output, shape index: {}]
  %s2 = sld [smem:[#allocation0]]
  $region49: #{tpu_custom_call.1} parent=0
    _
  %s4 = ssub.s32 1, %s2
  %s5 = scalar_select 0, %s4, %s2
  $region1: #{tpu_custom_call.1} parent=0
    #allocation4 [shape = 'u8[8192]{0}', space=vmem, size = 0x2000, scoped, tag = 'input window, operand 0']
    #allocation5 [shape = 's32[2]{0}', space=sflag, size = 0x8, scoped, tag = 'scoped memory for tpu_custom_call.1']
    #allocation6 [shape = 's32[2]{0}', space=sflag, size = 0x8, scoped, tag = 'scoped memory for tpu_custom_call.1']
    #allocation7 [shape = 'u8[512]{0}', space=vmem, size = 0x400, scoped, tag = 'output window, operand 0, single buffered']
    %6 = vsyncpa [#allocation5], 0
    %s7 = scalar_lea.sflag [#allocation5], 1
    %8 = vsyncpa %s7, 0
    %9 = vsyncpa [#allocation6], 0
    loop: start=0, step=1, limit=4
    $region2: #{tpu_custom_call.1} parent=1 // loop_pre_header
      _
    $region3: #{tpu_custom_call.1} parent=1 // loop_header
      %s11 = sphi 0, %s15
      %p12 = scmp.ge.s32.totalorder %s11, 4
      %s21 = sphi 0, %s23
      %s24 = sphi 0, %s21
      %s25 = sphi 0, %s24
      %s41 = sphi 0, %s25
      %s45 = sphi 0, %s45
      %s47 = sphi 0, %s45
      %s48 = sphi 0, %s47
      %s62 = sphi 0, %s48
    $region4: #{tpu_custom_call.1} parent=1 // loop_header_branch
      %14 = sbr.rel (%p12) target = $region8
    $region5: #{tpu_custom_call.1} parent=1 // loop_body
      %s16 = ssub.s32 %s11, 1
      %s17 = ssub.s32 %s11, 2
      %s18 = sadd.s32 %s11, 1
      %s19 = ssub.s32 %s11, %s18
      %p20 = scmp.eq.s32.totalorder %s19, 0
      %s22 = sadd.s32 %s21, 1
      %s23 = scalar_select %p20, %s21, %s22
      %p26 = pneg %p20
      %p27 = scmp.eq.s32.totalorder %s11, 1
      %p28 = por %p26, %p27
      %p29 = scmp.ne.s32.totalorder %s21, %s24
      %p30 = scmp.eq.s32.totalorder %s11, 0
      %p31 = por %p29, %p30
      %p32 = scmp.ne.s32.totalorder %s21, %s24
      %p33 = scmp.eq.s32.totalorder %s16, 1
      %p34 = por %p32, %p33
      %p35 = scmp.ne.s32.totalorder %s24, %s25
      %p36 = scmp.eq.s32.totalorder %s16, 0
      %p37 = por %p35, %p36
      %p38 = scmp.ne.s32.totalorder %s24, %s25
      %p39 = scmp.eq.s32.totalorder %s17, 1
      %p40 = por %p38, %p39
      %p42 = scmp.ne.s32.totalorder %s25, %s41
      %p43 = scmp.eq.s32.totalorder %s17, 0
      %p44 = por %p42, %p43
      %s46 = sadd.s32 %s45, 1
      %p49 = scmp.eq.s32.totalorder %s11, 1
      %p50 = scmp.ne.s32.totalorder %s45, %s47
      %p51 = scmp.eq.s32.totalorder %s11, 0
      %p52 = por %p50, %p51
      %p53 = scmp.ne.s32.totalorder %s45, %s47
      %p54 = scmp.eq.s32.totalorder %s16, 1
      %p55 = por %p53, %p54
      %p56 = scmp.ne.s32.totalorder %s47, %s48
      %p57 = scmp.eq.s32.totalorder %s16, 0
      %p58 = por %p56, %p57
      %p59 = scmp.ne.s32.totalorder %s47, %s48
      %p60 = scmp.eq.s32.totalorder %s17, 1
      %p61 = por %p59, %p60
      %p63 = scmp.ne.s32.totalorder %s48, %s62
      %p64 = scmp.eq.s32.totalorder %s17, 0
      %p65 = por %p63, %p64
      %p66 = scmp.le.s32.totalorder 1, %s11
      %p67 = scmp.lt.s32.totalorder %s11, 3
      %p68 = pnand %p66, %p67
      %p69 = pneg %p68
      // Predicated region
      $region9: #{tpu_custom_call.1} parent=5 // pred_check
        _
      $region10: #{tpu_custom_call.1} parent=5 // pred_check_branch
        %71 = sbr.rel (%p68) target = $region12
      $region11: #{tpu_custom_call.1} parent=5 // pred_region
        %s72 = ssub.s32 %s11, 1
      $region12: #{tpu_custom_call.1} parent=5 // pred_fallthru
        _
      %p73 = scmp.lt.s32.totalorder %s11, 2
      // Predicated region
      $region13: #{tpu_custom_call.1} parent=5 // pred_check
        %p74 = pneg %p73
      $region14: #{tpu_custom_call.1} parent=5 // pred_check_branch
        %76 = sbr.rel (%p74) target = $region16
      $region15: #{tpu_custom_call.1} parent=5 // pred_region
        // Predicated region
        $region17: #{tpu_custom_call.1} parent=15 // pred_check
          %p77 = pneg %p31
        $region18: #{tpu_custom_call.1} parent=15 // pred_check_branch
          %79 = sbr.rel (%p77) target = $region20
        $region19: #{tpu_custom_call.1} parent=15 // pred_region
          %s80 = sand.u32 %s21, 1
          %s81 = scalar_lea.sflag [#allocation5], %s80
          %s82 = sand.u32 %s21, 1
          %s83 = smul.addr %s82, 8
          %s84 = scalar_lea.vmem [#allocation4], %s83
          %86 = vsyncadd %s81, 0
          %s87 = smul.addr %s11, 8
          %s88 = scalar_lea.hbm %s0, %s87
          %s90 = sshll.u32 %s88, 4
          %s91 = int_to_ptr.hbm [resolvable:$true] %s90
          %s92 = sshll.u32 %s84, 4
          %s93 = int_to_ptr.vmem [resolvable:$true] %s92
          %95 = dma.hbm_to_vmem [thread:$0]  %s91, 128, %s93, %s81
        $region20: #{tpu_custom_call.1} parent=15 // pred_fallthru
          _
      $region16: #{tpu_custom_call.1} parent=5 // pred_fallthru
        _
      %p96 = scmp.le.s32.totalorder 1, %s11
      %p97 = scmp.lt.s32.totalorder %s11, 3
      %p98 = pnand %p96, %p97
      %p99 = pneg %p98
      // Predicated region
      $region21: #{tpu_custom_call.1} parent=5 // pred_check
        _
      $region22: #{tpu_custom_call.1} parent=5 // pred_check_branch
        %101 = sbr.rel (%p98) target = $region24
      $region23: #{tpu_custom_call.1} parent=5 // pred_region
        %s102 = ssub.s32 %s11, 1
        %s103 = sand.u32 %s24, 1
        %s104 = scalar_lea.sflag [#allocation5], %s103
        %s105 = sand.u32 %s24, 1
        %s106 = smul.addr %s105, 8
        %s107 = scalar_lea.vmem [#allocation4], %s106
        // Predicated region
        $region25: #{tpu_custom_call.1} parent=23 // pred_check
          %p108 = pneg %p37
        $region26: #{tpu_custom_call.1} parent=23 // pred_check_branch
          %110 = sbr.rel (%p108) target = $region28
        $region27: #{tpu_custom_call.1} parent=23 // pred_region
          %112 = dma.done %s104, 128
        $region28: #{tpu_custom_call.1} parent=23 // pred_fallthru
          _
        %s113 = sand.u32 %s24, 1
        %s114 = scalar_lea.sflag [#allocation5], %s113
        %s115 = sand.u32 %s24, 1
        %s116 = smul.addr %s115, 8
        %s117 = scalar_lea.vmem [#allocation4], %s116
        %p118 = pneg %p37
        %p119 = pneg %p34
        %p120 = pneg %p58
        %p121 = pneg %p55
        %p122 = scmp.eq.s32.totalorder %s16, 0
        // Predicated region
        $region29: #{tpu_custom_call.1} parent=23 // pred_check
          %p123 = pneg %p122
        $region30: #{tpu_custom_call.1} parent=23 // pred_check_branch
          %125 = sbr.rel (%p123) target = $region32
        $region31: #{tpu_custom_call.1} parent=23 // pred_region
          %vm126 = vcmask 261120
          %127 = vst.msk [vmem:[#allocation2] sm:$0xff] %vm126, 0.0
          %128 = vst.msk [vmem:[#allocation3] sm:$0xff] %vm126, 0.0
        $region32: #{tpu_custom_call.1} parent=23 // pred_fallthru
          _
        %v129 = vld [vmem:[%s107] sm:$0xff]
        %v130 = vlaneseq
        %v131 = vshrl.u32 %v130, 7
        %s132 = smul.u32 %s16, 8
        %v133 = vstv %s132
        %v134 = vadd.s32 %v133, %v131
        %vm135 = vcmp.lt.s32.totalorder %v134, 10
        %v136 = vsel %vm135, 1, 0
        %vm137 = vcmp.eq.s32.totalorder %v136, 1
        %v138 = vsel %vm137, %v129, 0.0
        %v139 = vld [vmem:[#allocation2] sm:$0xff]
        %v140 = vadd.f32 %v138, 0.0
        %v141 = vadd.f32 %v139, %v140
        %vm142 = vcmask 261120
        %143 = vst.msk [vmem:[#allocation2] sm:$0xff] %vm142, %v141
        %v144 = vld [vmem:[#allocation3] sm:$0xff]
        %v145 = vmul.f32 %v138, %v138
        %v146 = vadd.f32 %v145, 0.0
        %v147 = vadd.f32 %v144, %v146
        %148 = vst.msk [vmem:[#allocation3] sm:$0xff] %vm142, %v147
        %p149 = scmp.eq.s32.totalorder %s16, 1
        // Predicated region
        $region33: #{tpu_custom_call.1} parent=23 // pred_check
          %p150 = pneg %p149
        $region34: #{tpu_custom_call.1} parent=23 // pred_check_branch
          %152 = sbr.rel (%p150) target = $region36
        $region35: #{tpu_custom_call.1} parent=23 // pred_region
          %v153 = vld [vmem:[#allocation2] sm:$0xff]
          %v154 = vsel %vm142, %v153, 0.0
          %v155 = vrot.slane %v154, 4
          %v156 = vadd.f32 %v154, %v155
          %v157 = vrot.slane %v156, 2
          %v158 = vadd.f32 %v156, %v157
          %v159 = vrot.slane %v158, 1
          %v160 = vadd.f32 %v158, %v159
          %v161 = vmul.f32 %v160, %v160
          %v162 = vsel %vm142, %v161, 0.0
          %163 = vadd.xlane.f32.xlu0 %v162
          %v164 = vpop.xlane.xlu0 %163
          %v165 = vld [vmem:[#allocation3] sm:$0xff]
          %v166 = vsel %vm142, %v165, 0.0
          %v167 = vrot.slane %v166, 4
          %v168 = vadd.f32 %v166, %v167
          %v169 = vrot.slane %v168, 2
          %v170 = vadd.f32 %v168, %v169
          %v171 = vrot.slane %v170, 1
          %v172 = vadd.f32 %v170, %v171
          %v173 = vsel %vm142, %v172, 0.0
          %174 = vadd.xlane.f32.xlu0 %v173
          %v175 = vpop.xlane.xlu0 %174
          %v176 = vsub.f32 %v164, %v175
          %v177 = vmul.f32 %v175, 90.0
          %v178 = vrcp.pop %v177
          %v179 = vmul.f32 %v177, %v178
          %v180 = vsub.f32 1.0, %v179
          %v181 = vmul.f32 %v178, %v180
          %v182 = vadd.f32 %v178, %v181
          %vm183 = vweird.f32 %v177
          %vm184 = vweird.f32 %v178
          %vm185 = vmor %vm183, %vm184
          %v186 = vsel %vm185, %v178, %v182
          %v187 = vand.u32 2147483647, %v177
          %vm188 = vcmp.eq.f32.partialorder %v187, 8.507059e+37
          %v189 = vand.u32 %v177, 2147483648
          %v190 = vor.u32 1.1754944e-38, %v189
          %v191 = vsel %vm188, %v190, %v186
          %v192 = vmul.f32 %v176, %v191
          %v193 = vmul.f32 %v192, 1.442695
          %v194 = vpow.pop %v193
          %v195 = vlog2.pop %v194
          %v196 = vmul.f32 %v195, 0.6931472
          %vm197 = vcmask 0
          %198 = vst.msk [vmem:[#allocation7] sm:$0x1] %vm197, %v196
        $region36: #{tpu_custom_call.1} parent=23 // pred_fallthru
          _
        // Predicated region
        $region37: #{tpu_custom_call.1} parent=23 // pred_check
          %p199 = pneg %p55
        $region38: #{tpu_custom_call.1} parent=23 // pred_check_branch
          %201 = sbr.rel (%p199) target = $region40
        $region39: #{tpu_custom_call.1} parent=23 // pred_region
          %203 = vsyncadd [#allocation6], 0
          %s205 = sshll.u32 [#allocation7], 4
          %s206 = int_to_ptr.vmem [resolvable:$true] %s205
          %s207 = sshll.u32 %s1, 4
          %s208 = int_to_ptr.hbm [resolvable:$true] %s207
          %210 = dma.vmem_to_hbm [thread:$0]  %s206, 16, %s208, [#allocation6]
        $region40: #{tpu_custom_call.1} parent=23 // pred_fallthru
          _
        // Predicated region
        $region41: #{tpu_custom_call.1} parent=23 // pred_check
          %p211 = pneg %p55
        $region42: #{tpu_custom_call.1} parent=23 // pred_check_branch
          %213 = sbr.rel (%p211) target = $region44
        $region43: #{tpu_custom_call.1} parent=23 // pred_region
          %215 = dma.done [#allocation6], 16
        $region44: #{tpu_custom_call.1} parent=23 // pred_fallthru
          _
      $region24: #{tpu_custom_call.1} parent=5 // pred_fallthru
        _
      %p216 = scmp.le.s32.totalorder 2, %s11
      // Predicated region
      $region45: #{tpu_custom_call.1} parent=5 // pred_check
        %p217 = pneg %p216
      $region46: #{tpu_custom_call.1} parent=5 // pred_check_branch
        %219 = sbr.rel (%p217) target = $region48
      $region47: #{tpu_custom_call.1} parent=5 // pred_region
        %s220 = ssub.s32 %s11, 2
      $region48: #{tpu_custom_call.1} parent=5 // pred_fallthru
        _
    $region6: #{tpu_custom_call.1} parent=1 // loop_footer
      %s15 = sadd.s32 1, %s11
    $region7: #{tpu_custom_call.1} parent=1 // loop_footer_branch
      %10 = sbr.rel target = $region3
    $region8: #{tpu_custom_call.1} parent=1 // loop_exit
      _
    %221 = vsyncpa [#allocation5], 1
    %s222 = scalar_lea.sflag [#allocation5], 1
    %223 = vsyncpa %s222, 1
    %224 = vsyncpa [#allocation6], 1
    %s225 = scalar_lea.sflag [#allocation6], 1
    %226 = vsyncpa %s225, 1

</llo_original>
